<compile_context>
chip_gen: v5e
topology: v5e:2x2
jax: 0.10.0
libtpu: 0.0.40
codegen_flags: <defaults>
</compile_context>

<pallas_src>
import functools

import numpy as np
import jax
import jax.numpy as jnp
from jax import lax
from jax.experimental import pallas as pl
from jax.experimental.pallas import tpu as pltpu


def _masked_conv2d_gemm_kernel(w_ref, p_ref, b_ref, o_ref):
    """One grid step computes a (Cout, TILE_R) slab of the transposed output.

    w_ref: (Cout, K)        pre-masked im2col weights, bf16 (resident block)
    p_ref: (K, TILE_R)      im2col activation patches for this row tile, bf16
    b_ref: (Cout, 1)        bias, f32 (resident block)
    o_ref: (Cout, TILE_R)   output slab, f32 (lane-dense store)
    """
    acc = jnp.dot(w_ref[...], p_ref[...],
                  preferred_element_type=jnp.float32)      # MXU, f32 accumulate
    o_ref[...] = (acc + b_ref[...]).astype(o_ref.dtype)    # lane-broadcast bias


@functools.partial(jax.jit, static_argnums=(4,))
def masked_conv2d(x_nchw, weight_oihw, bias, mask_oihw, padding):
    """PixelCNN MaskedConv2d forward: y = conv2d(x, weight * mask, bias, pad=padding)."""
    N, Cin, H, W = x_nchw.shape
    Cout, _, kH, kW = weight_oihw.shape
    Hp, Wp = H + 2 * padding, W + 2 * padding
    Ho, Wo = Hp - kH + 1, Wp - kW + 1
    K = kH * kW * Cin          # folded contraction dim (>=128 at real widths)
    R = N * Ho * Wo            # flattened output-pixel axis (lane dim)

    compute_dtype = jnp.bfloat16

    # --- static weight prep: apply the causal mask once, im2col layout, bf16.
    # (Cout, Cin, kH, kW) -> (Cout, kH, kW, Cin) -> (Cout, K); column order
    # k = kh*kW*Cin + kw*Cin + ci matches the patch construction below.
    w_t = (weight_oihw * mask_oihw).transpose(0, 2, 3, 1)
    w_t = w_t.reshape(Cout, K).astype(compute_dtype)
    b2 = bias.reshape(Cout, 1).astype(jnp.float32)

    # --- activation prep (XLA, fused under jit): pad + im2col, built already
    # transposed so the flattened (n, h, w) row axis is the kernel's lane dim.
    x_pad = jnp.pad(x_nchw.astype(compute_dtype),
                    ((0, 0), (0, 0), (padding, padding), (padding, padding)))
    xt = x_pad.transpose(1, 0, 2, 3)                        # (Cin, N, Hp, Wp)
    pieces = []
    for kh in range(kH):
        for kw in range(kW):
            pieces.append(xt[:, :, kh:kh + Ho, kw:kw + Wo].reshape(Cin, R))
    patches_t = jnp.concatenate(pieces, axis=0)             # (K, R)

    # --- tiled, pipelined GEMM on the MXU -----------------------------------
    tile_r = 256 if R % 256 == 0 else R      # lane-dense row tiles (mult of 128)

    out_t = pl.pallas_call(
        _masked_conv2d_gemm_kernel,
        out_shape=jax.ShapeDtypeStruct((Cout, R), jnp.float32),
        grid=(R // tile_r,),
        in_specs=[
            # Weights & bias: same block index every step -> DMA'd once,
            # resident in VMEM for the whole grid.
            pl.BlockSpec((Cout, K), lambda r: (0, 0)),
            # Activation patches: one lane-dense (K, tile_r) tile per step,
            # double-buffered by the Pallas pipeline.
            pl.BlockSpec((K, tile_r), lambda r: (0, r)),
            pl.BlockSpec((Cout, 1), lambda r: (0, 0)),
        ],
        out_specs=pl.BlockSpec((Cout, tile_r), lambda r: (0, r)),
        compiler_params=pltpu.CompilerParams(
            dimension_semantics=("parallel",)),    # independent tiles; 2 TCs on v7x
    )(w_t, patches_t, b2)

    # (Cout, N*Ho*Wo) -> NCHW
    out = out_t.reshape(Cout, N, Ho, Wo).transpose(1, 0, 2, 3)
    return out.astype(x_nchw.dtype)


def make_pixelcnn_mask(mask_type, cout, cin, kH, kW):
    """Replicates MaskedConv2d.__init__ mask construction (OIHW layout)."""
    assert mask_type in ('A', 'B')
    mask = np.ones((cout, cin, kH, kW), dtype=np.float32)
    mask[:, :, kH // 2, kW // 2 + (mask_type == 'B'):] = 0.0
    mask[:, :, kH // 2 + 1:] = 0.0
    return jnp.asarray(mask)


if __name__ == "__main__":
    # Small, deterministic configuration (PixelCNN first layer, mask type 'A').
    N, Cin, H, W = 2, 4, 16, 16
    Cout, kH, kW = 8, 3, 3
    padding = 1
    mask_type = 'A'

    key = jax.random.PRNGKey(0)
    kx, kw_, kb = jax.random.split(key, 3)

    x = jax.random.normal(kx, (N, Cin, H, W), dtype=jnp.float32)
    weight = jax.random.normal(kw_, (Cout, Cin, kH, kW), dtype=jnp.float32) * 0.1
    bias = jax.random.normal(kb, (Cout,), dtype=jnp.float32) * 0.1
    mask = make_pixelcnn_mask(mask_type, Cout, Cin, kH, kW)

    out = masked_conv2d(x, weight, bias, mask, padding)
    out = jax.block_until_ready(out)

    # Reference: plain XLA f32 conv with the masked weight (same semantics as
    # nn.Conv2d forward after `weight.data *= mask`).
    w_masked = weight * mask
    ref = lax.conv_general_dilated(
        x, w_masked, window_strides=(1, 1),
        padding=((padding, padding), (padding, padding)),
        dimension_numbers=('NCHW', 'OIHW', 'NCHW'),
    ) + bias.reshape(1, Cout, 1, 1)
    ref = jax.block_until_ready(ref)

    assert out.shape == (N, Cout, H, W), out.shape
    # bf16 matmul operands + f32 accumulation -> loosened tolerance vs f32 ref.
    assert np.allclose(np.asarray(out), np.asarray(ref), atol=2e-2, rtol=2e-2)
    print("KERNEL_OK")
</pallas_src>

<mosaic_0001>
module attributes {stable_mosaic.version = 11 : i64} {
  func.func @_masked_conv2d_gemm_kernel(%arg0: i32, %arg1: memref<8x36xbf16, #tpu.memory_space<vmem>>, %arg2: memref<36x256xbf16, #tpu.memory_space<vmem>>, %arg3: memref<8x1xf32, #tpu.memory_space<vmem>>, %arg4: memref<8x256xf32, #tpu.memory_space<vmem>>) attributes {dimension_semantics = [#tpu.dimension_semantics<parallel>], iteration_bounds = array<i64: 2>, scalar_prefetch = 0 : i64, scratch_operands = 0 : i64, tpu.core_type = #tpu.core_type<tc>, window_params = [{pipeline_mode = #tpu.pipeline_mode<synchronous>, transform_indices = @transform_0, window_bounds = array<i64: 8, 36>}, {transform_indices = @transform_1, window_bounds = array<i64: 36, 256>}, {pipeline_mode = #tpu.pipeline_mode<synchronous>, transform_indices = @transform_2, window_bounds = array<i64: 8, 1>}, {transform_indices = @transform_3, window_bounds = array<i64: 8, 256>}]} {
    %c0 = arith.constant 0 : index
    %c0_0 = arith.constant 0 : index
    %0 = vector.load %arg1[%c0, %c0_0] : memref<8x36xbf16, #tpu.memory_space<vmem>>, vector<8x36xbf16>
    %c0_1 = arith.constant 0 : index
    %c0_2 = arith.constant 0 : index
    %1 = vector.load %arg2[%c0_1, %c0_2] : memref<36x256xbf16, #tpu.memory_space<vmem>>, vector<36x256xbf16>
    %cst = arith.constant dense<0.000000e+00> : vector<8x256xf32>
    %2 = tpu.matmul %0, %1, %cst {dimension_numbers = #tpu.dot_dimension_numbers<[1], [0], [0], [1], [0, 0, 1, 1], [], []>} : vector<8x36xbf16>, vector<36x256xbf16>, vector<8x256xf32> -> vector<8x256xf32>
    %c0_3 = arith.constant 0 : index
    %c0_4 = arith.constant 0 : index
    %3 = vector.load %arg3[%c0_3, %c0_4] : memref<8x1xf32, #tpu.memory_space<vmem>>, vector<8x1xf32>
    %4 = vector.broadcast %3 : vector<8x1xf32> to vector<8x256xf32>
    %5 = arith.addf %2, %4 : vector<8x256xf32>
    %c0_5 = arith.constant 0 : index
    %c0_6 = arith.constant 0 : index
    %6 = vector.load %arg4[%c0_5, %c0_6] : memref<8x256xf32, #tpu.memory_space<vmem>>, vector<8x256xf32>
    tpu.vector_store %arg4[%c0_5, %c0_6], %5 {strides = array<i32>} : memref<8x256xf32, #tpu.memory_space<vmem>>, vector<8x256xf32>,
    return
  }
  func.func @transform_0(%arg0: i32) -> (i32, i32) {
    %c0_i32 = arith.constant 0 : i32
    %c0_i32_0 = arith.constant 0 : i32
    %c0_i32_1 = arith.constant 0 : i32
    return %c0_i32, %c0_i32_0 : i32, i32
  }
  func.func @transform_1(%arg0: i32) -> (i32, i32) {
    %c0_i32 = arith.constant 0 : i32
    %c0_i32_0 = arith.constant 0 : i32
    return %c0_i32, %arg0 : i32, i32
  }
  func.func @transform_2(%arg0: i32) -> (i32, i32) {
    %c0_i32 = arith.constant 0 : i32
    %c0_i32_0 = arith.constant 0 : i32
    %c0_i32_1 = arith.constant 0 : i32
    return %c0_i32, %c0_i32_0 : i32, i32
  }
  func.func @transform_3(%arg0: i32) -> (i32, i32) {
    %c0_i32 = arith.constant 0 : i32
    %c0_i32_0 = arith.constant 0 : i32
    return %c0_i32, %arg0 : i32, i32
  }
}

</mosaic_0001>

<llo_original>
// kernel: masked_conv2d.1
$region0: #{masked_conv2d.1}
  #allocation0 [shape = 'u32[]', space=smem, size = 0x4, offset = 0x4, fixed_abs, tag = 'smem constant byte address 0x4 - core index']
  #allocation1 [shape = 'u32[72,128]{1,0:T(1,128)}', space=vmem, size = 0x9000, scoped, tag = 'internal scratch']
  %s0 = inlined_call_operand.vmem [shape: bf16[8,36], index: 0, kind: input, shape index: {}]
  %s1 = inlined_call_operand.vmem [shape: bf16[36,512], index: 1, kind: input, shape index: {}]
  %s2 = inlined_call_operand.vmem [shape: f32[8,1], index: 2, kind: input, shape index: {}]
  %s3 = inlined_call_operand.vmem [shape: f32[8,512], index: 3, kind: output, shape index: {}]
  %s4 = sld [smem:[#allocation0]]
  $region83: #{masked_conv2d.1} parent=0
    _
  %s6 = ssub.s32 1, %s4
  %s7 = scalar_select 0, %s6, %s4
  $region1: #{masked_conv2d.1} parent=0
    #allocation2 [shape = 'u8[40960]{0}', space=vmem, size = 0xa000, scoped, tag = 'input window, operand 1']
    loop: start=0, step=1, limit=4
    $region2: #{masked_conv2d.1} parent=1 // loop_pre_header
      _
    $region3: #{masked_conv2d.1} parent=1 // loop_header
      %s9 = sphi 0, %s13
      %p10 = scmp.ge.s32.totalorder %s9, 4
      %s17 = sphi 0, %s17
      %s19 = sphi 0, %s17
      %s20 = sphi 0, %s19
      %s34 = sphi 0, %s20
      %s40 = sphi 0, %s42
      %s43 = sphi 0, %s40
      %s44 = sphi 0, %s43
      %s60 = sphi 0, %s44
      %s64 = sphi 0, %s64
      %s66 = sphi 0, %s64
      %s67 = sphi 0, %s66
      %s81 = sphi 0, %s67
      %s87 = sphi 0, %s89
      %s90 = sphi 0, %s87
      %s91 = sphi 0, %s90
      %s107 = sphi 0, %s91
    $region4: #{masked_conv2d.1} parent=1 // loop_header_branch
      %12 = sbr.rel (%p10) target = $region8
    $region5: #{masked_conv2d.1} parent=1 // loop_body
      %s14 = ssub.s32 %s9, 1
      %s15 = ssub.s32 %s9, 2
      %s16 = sadd.s32 %s9, 1
      %s18 = sadd.s32 %s17, 1
      %p21 = scmp.eq.s32.totalorder %s9, 1
      %p22 = scmp.ne.s32.totalorder %s17, %s19
      %p23 = scmp.eq.s32.totalorder %s9, 0
      %p24 = por %p22, %p23
      %p25 = scmp.ne.s32.totalorder %s17, %s19
      %p26 = scmp.eq.s32.totalorder %s14, 1
      %p27 = por %p25, %p26
      %p28 = scmp.ne.s32.totalorder %s19, %s20
      %p29 = scmp.eq.s32.totalorder %s14, 0
      %p30 = por %p28, %p29
      %p31 = scmp.ne.s32.totalorder %s19, %s20
      %p32 = scmp.eq.s32.totalorder %s15, 1
      %p33 = por %p31, %p32
      %p35 = scmp.ne.s32.totalorder %s20, %s34
      %p36 = scmp.eq.s32.totalorder %s15, 0
      %p37 = por %p35, %p36
      %s38 = ssub.s32 %s9, %s16
      %p39 = scmp.eq.s32.totalorder %s38, 0
      %s41 = sadd.s32 %s40, 1
      %s42 = scalar_select %p39, %s40, %s41
      %p45 = pneg %p39
      %p46 = scmp.eq.s32.totalorder %s9, 1
      %p47 = por %p45, %p46
      %p48 = scmp.ne.s32.totalorder %s40, %s43
      %p49 = scmp.eq.s32.totalorder %s9, 0
      %p50 = por %p48, %p49
      %p51 = scmp.ne.s32.totalorder %s40, %s43
      %p52 = scmp.eq.s32.totalorder %s14, 1
      %p53 = por %p51, %p52
      %p54 = scmp.ne.s32.totalorder %s43, %s44
      %p55 = scmp.eq.s32.totalorder %s14, 0
      %p56 = por %p54, %p55
      %p57 = scmp.ne.s32.totalorder %s43, %s44
      %p58 = scmp.eq.s32.totalorder %s15, 1
      %p59 = por %p57, %p58
      %p61 = scmp.ne.s32.totalorder %s44, %s60
      %p62 = scmp.eq.s32.totalorder %s15, 0
      %p63 = por %p61, %p62
      %s65 = sadd.s32 %s64, 1
      %p68 = scmp.eq.s32.totalorder %s9, 1
      %p69 = scmp.ne.s32.totalorder %s64, %s66
      %p70 = scmp.eq.s32.totalorder %s9, 0
      %p71 = por %p69, %p70
      %p72 = scmp.ne.s32.totalorder %s64, %s66
      %p73 = scmp.eq.s32.totalorder %s14, 1
      %p74 = por %p72, %p73
      %p75 = scmp.ne.s32.totalorder %s66, %s67
      %p76 = scmp.eq.s32.totalorder %s14, 0
      %p77 = por %p75, %p76
      %p78 = scmp.ne.s32.totalorder %s66, %s67
      %p79 = scmp.eq.s32.totalorder %s15, 1
      %p80 = por %p78, %p79
      %p82 = scmp.ne.s32.totalorder %s67, %s81
      %p83 = scmp.eq.s32.totalorder %s15, 0
      %p84 = por %p82, %p83
      %s85 = ssub.s32 %s9, %s16
      %p86 = scmp.eq.s32.totalorder %s85, 0
      %s88 = sadd.s32 %s87, 1
      %s89 = scalar_select %p86, %s87, %s88
      %p92 = pneg %p86
      %p93 = scmp.eq.s32.totalorder %s9, 1
      %p94 = por %p92, %p93
      %p95 = scmp.ne.s32.totalorder %s87, %s90
      %p96 = scmp.eq.s32.totalorder %s9, 0
      %p97 = por %p95, %p96
      %p98 = scmp.ne.s32.totalorder %s87, %s90
      %p99 = scmp.eq.s32.totalorder %s14, 1
      %p100 = por %p98, %p99
      %p101 = scmp.ne.s32.totalorder %s90, %s91
      %p102 = scmp.eq.s32.totalorder %s14, 0
      %p103 = por %p101, %p102
      %p104 = scmp.ne.s32.totalorder %s90, %s91
      %p105 = scmp.eq.s32.totalorder %s15, 1
      %p106 = por %p104, %p105
      %p108 = scmp.ne.s32.totalorder %s91, %s107
      %p109 = scmp.eq.s32.totalorder %s15, 0
      %p110 = por %p108, %p109
      %p111 = scmp.le.s32.totalorder 1, %s9
      %p112 = scmp.lt.s32.totalorder %s9, 3
      %p113 = pnand %p111, %p112
      %p114 = pneg %p113
      // Predicated region
      $region9: #{masked_conv2d.1} parent=5 // pred_check
        _
      $region10: #{masked_conv2d.1} parent=5 // pred_check_branch
        %116 = sbr.rel (%p113) target = $region12
      $region11: #{masked_conv2d.1} parent=5 // pred_region
        %s117 = ssub.s32 %s9, 1
        // Predicated region
        $region13: #{masked_conv2d.1} parent=11 // pred_check
          %p118 = pneg %p30
        $region14: #{masked_conv2d.1} parent=11 // pred_check_branch
          %120 = sbr.rel (%p118) target = $region16
        $region15: #{masked_conv2d.1} parent=11 // pred_region
          _
        $region16: #{masked_conv2d.1} parent=11 // pred_fallthru
          _
        // Predicated region
        $region17: #{masked_conv2d.1} parent=11 // pred_check
          %p121 = pneg %p77
        $region18: #{masked_conv2d.1} parent=11 // pred_check_branch
          %123 = sbr.rel (%p121) target = $region20
        $region19: #{masked_conv2d.1} parent=11 // pred_region
          _
        $region20: #{masked_conv2d.1} parent=11 // pred_fallthru
          _
      $region12: #{masked_conv2d.1} parent=5 // pred_fallthru
        _
      %p124 = scmp.lt.s32.totalorder %s9, 2
      // Predicated region
      $region21: #{masked_conv2d.1} parent=5 // pred_check
        %p125 = pneg %p124
      $region22: #{masked_conv2d.1} parent=5 // pred_check_branch
        %127 = sbr.rel (%p125) target = $region24
      $region23: #{masked_conv2d.1} parent=5 // pred_region
        // Predicated region
        $region25: #{masked_conv2d.1} parent=23 // pred_check
          %p128 = pneg %p50
        $region26: #{masked_conv2d.1} parent=23 // pred_check_branch
          %130 = sbr.rel (%p128) target = $region28
        $region27: #{masked_conv2d.1} parent=23 // pred_region
          %s131 = sand.u32 %s40, 1
          %s132 = sand.u32 %s40, 1
          %s133 = smul.addr %s132, 40
          %s134 = scalar_lea.vmem [#allocation2], %s133
          %s135 = smul.u32 2, %s9
          %s136 = smul.addr %s135, 4
          %s137 = scalar_lea.vmem %s1, %s136
          // Predicated region
          $region29: #{masked_conv2d.1} parent=27 // pred_check
            _
          $region30: #{masked_conv2d.1} parent=27 // pred_check_branch
            %139 = sbr.rel (0) target = $region32
          $region31: #{masked_conv2d.1} parent=27 // pred_region
            // Predicated region
            $region33: #{masked_conv2d.1} parent=31 // pred_check
              _
            $region34: #{masked_conv2d.1} parent=31 // pred_check_branch
              %141 = sbr.rel (0) target = $region36
            $region35: #{masked_conv2d.1} parent=31 // pred_region
              // Predicated region
              $region48: #{masked_conv2d.1} parent=35 // pred_check
                _
              $region49: #{masked_conv2d.1} parent=35 // pred_check_branch
                %165 = sbr.rel (0) target = $region51
              $region50: #{masked_conv2d.1} parent=35 // pred_region
                loop: start=0, step=1, limit=1
                $region52: #{masked_conv2d.1} parent=50 // loop_pre_header
                  _
                $region53: #{masked_conv2d.1} parent=50 // loop_header
                  %s167 = sphi 0, %s171
                  %p168 = scmp.ge.s32.totalorder %s167, 1
                  %s172 = sphi %s137, %s137
                  %s173 = sphi %s134, %s134
                $region54: #{masked_conv2d.1} parent=50 // loop_header_branch
                  %170 = sbr.rel (%p168) target = $region58
                $region55: #{masked_conv2d.1} parent=50 // loop_body
                  %v174 = vld [vmem:[%s172] sm:$0xff]
                  %175 = vst [vmem:[%s173] sm:$0xff] %v174
                  %v176 = vld [vmem:[%s172 + $0x10] sm:$0xff]
                  %177 = vst [vmem:[%s173 + $0x8] sm:$0xff] %v176
                  %v178 = vld [vmem:[%s172 + $0x20] sm:$0xff]
                  %179 = vst [vmem:[%s173 + $0x10] sm:$0xff] %v178
                  %v180 = vld [vmem:[%s172 + $0x30] sm:$0xff]
                  %181 = vst [vmem:[%s173 + $0x18] sm:$0xff] %v180
                  %v182 = vld [vmem:[%s172 + $0x40] sm:$0xff]
                  %183 = vst [vmem:[%s173 + $0x20] sm:$0xff] %v182
                $region56: #{masked_conv2d.1} parent=50 // loop_footer
                  %s171 = sadd.s32 1, %s167
                $region57: #{masked_conv2d.1} parent=50 // loop_footer_branch
                  %166 = sbr.rel target = $region53
                $region58: #{masked_conv2d.1} parent=50 // loop_exit
                  _
              $region51: #{masked_conv2d.1} parent=35 // pred_fallthru
                _
              // Predicated region
              $region59: #{masked_conv2d.1} parent=35 // pred_check
                _
              $region60: #{masked_conv2d.1} parent=35 // pred_check_branch
                %185 = sbr.rel target = $region62
              $region61: #{masked_conv2d.1} parent=35 // pred_region
                _
              $region62: #{masked_conv2d.1} parent=35 // pred_fallthru
                _
            $region36: #{masked_conv2d.1} parent=31 // pred_fallthru
              _
            // Predicated region
            $region37: #{masked_conv2d.1} parent=31 // pred_check
              _
            $region38: #{masked_conv2d.1} parent=31 // pred_check_branch
              %143 = sbr.rel target = $region40
            $region39: #{masked_conv2d.1} parent=31 // pred_region
              %s145 = ssub.s32 256, 1
              loop: start=0, step=1, limit=1
              $region41: #{masked_conv2d.1} parent=39 // loop_pre_header
                _
              $region42: #{masked_conv2d.1} parent=39 // loop_header
                %s147 = sphi 0, %s151
                %p148 = scmp.ge.s32.totalorder %s147, 1
                %s152 = sphi %s137, %s137
                %s153 = sphi %s134, %s134
              $region43: #{masked_conv2d.1} parent=39 // loop_header_branch
                %150 = sbr.rel (%p148) target = $region47
              $region44: #{masked_conv2d.1} parent=39 // loop_body
                %v154 = vld [vmem:[%s152] sm:%s145]
                %155 = vst [vmem:[%s153] sm:%s145] %v154
                %v156 = vld [vmem:[%s152 + $0x10] sm:%s145]
                %157 = vst [vmem:[%s153 + $0x8] sm:%s145] %v156
                %v158 = vld [vmem:[%s152 + $0x20] sm:%s145]
                %159 = vst [vmem:[%s153 + $0x10] sm:%s145] %v158
                %v160 = vld [vmem:[%s152 + $0x30] sm:%s145]
                %161 = vst [vmem:[%s153 + $0x18] sm:%s145] %v160
                %v162 = vld [vmem:[%s152 + $0x40] sm:%s145]
                %163 = vst [vmem:[%s153 + $0x20] sm:%s145] %v162
              $region45: #{masked_conv2d.1} parent=39 // loop_footer
                %s151 = sadd.s32 1, %s147
              $region46: #{masked_conv2d.1} parent=39 // loop_footer_branch
                %146 = sbr.rel target = $region42
              $region47: #{masked_conv2d.1} parent=39 // loop_exit
                _
            $region40: #{masked_conv2d.1} parent=31 // pred_fallthru
              _
          $region32: #{masked_conv2d.1} parent=27 // pred_fallthru
            _
          %186 = vnop
        $region28: #{masked_conv2d.1} parent=23 // pred_fallthru
          _
      $region24: #{masked_conv2d.1} parent=5 // pred_fallthru
        _
      %p187 = scmp.le.s32.totalorder 1, %s9
      %p188 = scmp.lt.s32.totalorder %s9, 3
      %p189 = pnand %p187, %p188
      %p190 = pneg %p189
      // Predicated region
      $region63: #{masked_conv2d.1} parent=5 // pred_check
        _
      $region64: #{masked_conv2d.1} parent=5 // pred_check_branch
        %192 = sbr.rel (%p189) target = $region66
      $region65: #{masked_conv2d.1} parent=5 // pred_region
        %s193 = ssub.s32 %s9, 1
        %s194 = sand.u32 %s43, 1
        %s195 = sand.u32 %s43, 1
        %s196 = smul.addr %s195, 40
        %s197 = scalar_lea.vmem [#allocation2], %s196
        // Predicated region
        $region67: #{masked_conv2d.1} parent=65 // pred_check
          %p198 = pneg %p56
        $region68: #{masked_conv2d.1} parent=65 // pred_check_branch
          %200 = sbr.rel (%p198) target = $region70
        $region69: #{masked_conv2d.1} parent=65 // pred_region
          _
        $region70: #{masked_conv2d.1} parent=65 // pred_fallthru
          _
        %p201 = pneg %p30
        %p202 = pneg %p27
        %s203 = sand.u32 %s43, 1
        %s204 = sand.u32 %s43, 1
        %s205 = smul.addr %s204, 40
        %s206 = scalar_lea.vmem [#allocation2], %s205
        %p207 = pneg %p56
        %p208 = pneg %p53
        %p209 = pneg %p77
        %p210 = pneg %p74
        %p211 = pneg %p103
        %p212 = pneg %p100
        %s213 = smul.u32 2, %s14
        %p214 = scmp.lt.s32.totalorder %s213, 3
        %s215 = scalar_select %p214, %s213, 3
        %s216 = smul.addr %s215, 8
        %s217 = scalar_lea.vmem %s3, %s216
        %s218 = smul.u32 2, %s14
        %s219 = smul.u32 2, %s14
        %p220 = scmp.lt.s32.totalorder %s219, 3
        %s221 = scalar_select %p220, %s219, 3
        %s222 = smul.addr %s221, 8
        %s223 = scalar_lea.vmem %s3, %s222
        %s224 = smul.u32 2, %s14
        %v226 = vld [vmem:[%s0] sm:$0xf]
        %v227 = vld [vmem:[%s197] sm:$0xff]
        %v228 = vld [vmem:[%s197 + $0x8] sm:$0xff]
        %v229 = vld [vmem:[%s197 + $0x10] sm:$0xff]
        %v230 = vld [vmem:[%s197 + $0x18] sm:$0xff]
        %v231 = vld [vmem:[%s197 + $0x20] sm:$0x33]
        %v232 = vld [vmem:[%s2] sm:$0xff]
        %234 = vset.pattern.permute.xlu0 0
        %235 = vperm.xlu0 %234, %v232
        %v236 = vpop.permute.xlu0 %235
        %v243 = vunpack.c.l.b16 %v227
        %v244 = vunpack.c.h.b16 %v227
        %v245 = vunpack.c.l.b16 %v228
        %v246 = vunpack.c.h.b16 %v228
        %v247 = vunpack.c.l.b16 %v229
        %v248 = vunpack.c.h.b16 %v229
        %v249 = vunpack.c.l.b16 %v230
        %v250 = vunpack.c.h.b16 %v230
        %v251 = vunpack.c.l.b16 %v231
        %v252 = vunpack.c.h.b16 %v231
        %v253 = vpack.c.b16 %v245, %v243
        %v254 = vpack.c.b16 %v246, %v244
        %v255 = vpack.c.b16 %v249, %v247
        %v256 = vpack.c.b16 %v250, %v248
        %v257 = vpack.c.b16 %v251, %v251
        %v258 = vpack.c.b16 %v252, %v252
        %vm263 = vcmask 293888
        %v265 = vsel %vm263, %v226, 0
        %vm267 = vcmask 1041408
        %v269 = vsel %vm267, %v257, 0
        %v272 = vsel %vm267, %v258, 0
        %274 = vmatpush.bf16.msra.mxu0 0
        %275 = vmatpush.bf16.msra.mxu0 0
        %276 = vmatpush.bf16.msra.mxu0 0
        %277 = vmatpush.bf16.msra.mxu0 0
        %278 = vmatpush.bf16.msra.mxu0 0
        %279 = vmatpush.bf16.msra.mxu0 %v269
        %280 = vmatpush.bf16.msra.mxu0 %v255
        %281 = vmatpush.bf16.msra.mxu0 %v253
        %282 = vmatmul.bf16.gmra.mxu0 %v265
        %v283 = vpop.f32.mrf.mxu0
        %v284 = vadd.f32 %v236, %v283
        %v285 = vpop.f32.mrf.mxu0
        %286 = vdwg.mxu0
        %287 = vmatpush.bf16.msra.mxu0 0
        %288 = vmatpush.bf16.msra.mxu0 0
        %289 = vmatpush.bf16.msra.mxu0 0
        %290 = vmatpush.bf16.msra.mxu0 0
        %291 = vmatpush.bf16.msra.mxu0 0
        %292 = vmatpush.bf16.msra.mxu0 %v272
        %293 = vmatpush.bf16.msra.mxu0 %v256
        %294 = vmatpush.bf16.msra.mxu0 %v254
        %295 = vmatmul.bf16.gmra.mxu0 %v265
        %v296 = vpop.f32.mrf.mxu0
        %v297 = vadd.f32 %v236, %v296
        %v298 = vpop.f32.mrf.mxu0
        %299 = vdwg.mxu0
        %300 = vst [vmem:[%s223] sm:$0xff] %v284
        %301 = vst [vmem:[%s223 + $0x8] sm:$0xff] %v297
        %s302 = smul.u32 2, %s14
        %p303 = scmp.lt.s32.totalorder %s302, 3
        %s304 = scalar_select %p303, %s302, 3
        %s305 = smul.addr %s304, 8
        %s306 = scalar_lea.vmem %s3, %s305
        // Predicated region
        $region71: #{masked_conv2d.1} parent=65 // pred_check
          %p307 = pneg %p100
        $region72: #{masked_conv2d.1} parent=65 // pred_check_branch
          %309 = sbr.rel (%p307) target = $region74
        $region73: #{masked_conv2d.1} parent=65 // pred_region
          %s310 = smul.u32 2, %s14
        $region74: #{masked_conv2d.1} parent=65 // pred_fallthru
          _
      $region66: #{masked_conv2d.1} parent=5 // pred_fallthru
        _
      %p311 = scmp.le.s32.totalorder 2, %s9
      // Predicated region
      $region75: #{masked_conv2d.1} parent=5 // pred_check
        %p312 = pneg %p311
      $region76: #{masked_conv2d.1} parent=5 // pred_check_branch
        %314 = sbr.rel (%p312) target = $region78
      $region77: #{masked_conv2d.1} parent=5 // pred_region
        %s315 = ssub.s32 %s9, 2
        // Predicated region
        $region79: #{masked_conv2d.1} parent=77 // pred_check
          %p316 = pneg %p106
        $region80: #{masked_conv2d.1} parent=77 // pred_check_branch
          %318 = sbr.rel (%p316) target = $region82
        $region81: #{masked_conv2d.1} parent=77 // pred_region
          %s319 = smul.u32 2, %s15
          %p320 = scmp.lt.s32.totalorder %s319, 3
          %s321 = scalar_select %p320, %s319, 3
          %s322 = smul.addr %s321, 8
          %s323 = scalar_lea.vmem %s3, %s322
        $region82: #{masked_conv2d.1} parent=77 // pred_fallthru
          _
      $region78: #{masked_conv2d.1} parent=5 // pred_fallthru
        _
    $region6: #{masked_conv2d.1} parent=1 // loop_footer
      %s13 = sadd.s32 1, %s9
    $region7: #{masked_conv2d.1} parent=1 // loop_footer_branch
      %8 = sbr.rel target = $region3
    $region8: #{masked_conv2d.1} parent=1 // loop_exit
      _

</llo_original>
